<compile_context>
chip_gen: v5e
topology: v5e:2x2
jax: 0.10.0
libtpu: 0.0.40
codegen_flags: <defaults>
</compile_context>

<pallas_src>
import functools

import jax
import jax.numpy as jnp
from jax.experimental import pallas as pl
from jax.experimental.pallas import tpu as pltpu

_LANE = 128
_NUM_CORES = 2          # leading "parallel" axis for the stats pass (v7x megacore)
_FUSED_MAX_ROWS = 512   # single-tile fully fused fast path threshold
_TARGET_BLOCK_ROWS = 512


def _round_up(x, m):
    return (x + m - 1) // m * m


def _pad2(a, rows, cols):
    return jnp.pad(a, ((0, rows - a.shape[0]), (0, cols - a.shape[1])))


# -------------------- small-N fully fused single-tile kernel --------------------
def _fused_kernel(x_ref, w1_ref, b1_ref, g_ref, be_ref, w2_ref, b2_ref, o_ref,
                  *, n_valid, eps):
    # h = x @ W1 + b1 (bf16 MXU, f32 accumulate)
    h = jnp.dot(x_ref[...], w1_ref[...],
                preferred_element_type=jnp.float32) + b1_ref[...]

    n_pad = x_ref.shape[0]
    inv_n = 1.0 / n_valid
    if n_pad != n_valid:                      # static: mask zero-padded rows
        valid = jax.lax.broadcasted_iota(jnp.int32, h.shape, 0) < n_valid
        hm = jnp.where(valid, h, 0.0)
    else:
        valid = None
        hm = h

    # Batch statistics (biased variance, centered formulation — everything is
    # already resident in VMEM so the extra pass is free).
    mean = jnp.sum(hm, axis=0, keepdims=True) * inv_n
    d = h - mean
    if valid is not None:
        d = jnp.where(valid, d, 0.0)
    var = jnp.sum(d * d, axis=0, keepdims=True) * inv_n

    scale = g_ref[...] * jax.lax.rsqrt(var + eps)
    shift = be_ref[...] - mean * scale
    hn = jnp.maximum(h * scale + shift, 0.0)

    o_ref[...] = (jnp.dot(hn.astype(jnp.bfloat16), w2_ref[...],
                          preferred_element_type=jnp.float32)
                  + b2_ref[...]).astype(o_ref.dtype)


# ---------- pass 1 (large N): accumulate per-core batch sum / sum-of-squares ----------
def _stats_kernel(x_ref, w1_ref, b1_ref, sum_ref, sumsq_ref,
                  *, n_valid, block_rows, blocks_per_core, mask_tail):
    c = pl.program_id(0)   # "parallel" core axis
    i = pl.program_id(1)   # "arbitrary" accumulation axis (per-core row blocks)

    @pl.when(i == 0)
    def _():
        sum_ref[...] = jnp.zeros_like(sum_ref)
        sumsq_ref[...] = jnp.zeros_like(sumsq_ref)

    h = jnp.dot(x_ref[...], w1_ref[...],
                preferred_element_type=jnp.float32) + b1_ref[...]

    def _accumulate(hv):
        sum_ref[...] += jnp.sum(hv, axis=0, keepdims=True)[None]
        sumsq_ref[...] += jnp.sum(hv * hv, axis=0, keepdims=True)[None]

    if mask_tail:
        start = (c * blocks_per_core + i) * block_rows
        has_pad = start + block_rows > n_valid

        @pl.when(has_pad)          # only blocks containing padded rows pay the mask
        def _():
            row = jax.lax.broadcasted_iota(jnp.int32, h.shape, 0) + start
            _accumulate(jnp.where(row < n_valid, h, 0.0))

        @pl.when(jnp.logical_not(has_pad))
        def _():
            _accumulate(h)
    else:
        _accumulate(h)


# ---------- pass 2 (large N): recompute h, fused BN scale/shift, ReLU, h @ W2 + b2 ----------
def _bn_relu_linear_kernel(x_ref, w1_ref, b1_ref, scale_ref, shift_ref,
                           w2_ref, b2_ref, o_ref):
    h = jnp.dot(x_ref[...], w1_ref[...],
                preferred_element_type=jnp.float32) + b1_ref[...]
    hn = jnp.maximum(h * scale_ref[...] + shift_ref[...], 0.0)
    o_ref[...] = (jnp.dot(hn.astype(jnp.bfloat16), w2_ref[...],
                          preferred_element_type=jnp.float32)
                  + b2_ref[...]).astype(o_ref.dtype)


def mlp_forward(x, w1, b1, gamma, beta, w2, b2, *, block_rows=None, eps=1e-5):
    """x: (N, nfeat); w1: (nfeat, nhid); w2: (nhid, nclass); (1, k) row vectors
    for b1/b2/gamma/beta. Reproduces MLP.forward with BatchNorm in train mode."""
    n, nfeat = x.shape
    nhid = w1.shape[1]
    nclass = w2.shape[1]

    f_p = _round_up(nfeat, _LANE)
    h_p = _round_up(nhid, _LANE)
    c_p = _round_up(nclass, _LANE)

    # Lane-pad params once; matmul operands go to bf16, BN params stay f32.
    w1b = _pad2(w1, f_p, h_p).astype(jnp.bfloat16)
    w2b = _pad2(w2, h_p, c_p).astype(jnp.bfloat16)
    b1p = _pad2(b1.reshape(1, -1), 1, h_p).astype(jnp.float32)
    b2p = _pad2(b2.reshape(1, -1), 1, c_p).astype(jnp.float32)
    gp = _pad2(gamma.reshape(1, -1), 1, h_p).astype(jnp.float32)
    bp = _pad2(beta.reshape(1, -1), 1, h_p).astype(jnp.float32)

    # ---------------- small-N fast path: one fused ungridded call ----------------
    if block_rows is None and n <= _FUSED_MAX_ROWS:
        n_p = _round_up(n, 16)
        xb = _pad2(x, n_p, f_p).astype(jnp.bfloat16)
        out_pad = pl.pallas_call(
            functools.partial(_fused_kernel, n_valid=n, eps=eps),
            out_shape=jax.ShapeDtypeStruct((n_p, c_p), jnp.float32),
        )(xb, w1b, b1p, gp, bp, w2b, b2p)
        return out_pad[:n, :nclass]

    # ---------------- large-N two-pass path ----------------
    if block_rows is None:
        total_blocks = _round_up(pl.cdiv(n, _TARGET_BLOCK_ROWS), _NUM_CORES)
        block_rows = _round_up(pl.cdiv(n, total_blocks), 16)
    else:
        block_rows = _round_up(block_rows, 16)
        total_blocks = _round_up(pl.cdiv(n, block_rows), _NUM_CORES)
    blocks_per_core = total_blocks // _NUM_CORES
    n_p = total_blocks * block_rows
    mask_tail = (n_p != n)

    xb = _pad2(x, n_p, f_p).astype(jnp.bfloat16)

    # Pass 1: per-core partial sums.  grid = (cores, row-blocks-per-core); the
    # core axis is "parallel" (megacore sharding), the row-block axis is the
    # "arbitrary" accumulator axis with resident (1,1,h_p) per-core outputs.
    psum, psumsq = pl.pallas_call(
        functools.partial(_stats_kernel, n_valid=n, block_rows=block_rows,
                          blocks_per_core=blocks_per_core, mask_tail=mask_tail),
        out_shape=(jax.ShapeDtypeStruct((_NUM_CORES, 1, h_p), jnp.float32),
                   jax.ShapeDtypeStruct((_NUM_CORES, 1, h_p), jnp.float32)),
        grid=(_NUM_CORES, blocks_per_core),
        in_specs=[
            pl.BlockSpec((block_rows, f_p),
                         lambda c, i: (c * blocks_per_core + i, 0)),
            pl.BlockSpec((f_p, h_p), lambda c, i: (0, 0)),
            pl.BlockSpec((1, h_p), lambda c, i: (0, 0)),
        ],
        out_specs=(pl.BlockSpec((1, 1, h_p), lambda c, i: (c, 0, 0)),
                   pl.BlockSpec((1, 1, h_p), lambda c, i: (c, 0, 0))),
        compiler_params=pltpu.CompilerParams(
            dimension_semantics=("parallel", "arbitrary")),
    )(xb, w1b, b1p)

    # Fold BN into scale/shift once, as tiny (1, h_p) JAX ops between the calls.
    inv_n = 1.0 / n
    mean = jnp.sum(psum, axis=0) * inv_n                       # (1, h_p)
    var = jnp.maximum(jnp.sum(psumsq, axis=0) * inv_n - mean * mean, 0.0)
    # TODO(synk): E[h^2]-E[h]^2 can cancel for huge/strongly-biased activations;
    # switch to a shifted/two-pass variance if exact PyTorch stats are critical.
    scale = gp * jax.lax.rsqrt(var + eps)
    shift = bp - mean * scale

    # Pass 2: recompute h from bf16 x (no f32 h HBM round-trip), fused BN,
    # ReLU, second matmul.  Row blocks are independent -> "parallel".
    out_pad = pl.pallas_call(
        _bn_relu_linear_kernel,
        out_shape=jax.ShapeDtypeStruct((n_p, c_p), jnp.float32),
        grid=(total_blocks,),
        in_specs=[
            pl.BlockSpec((block_rows, f_p), lambda i: (i, 0)),
            pl.BlockSpec((f_p, h_p), lambda i: (0, 0)),
            pl.BlockSpec((1, h_p), lambda i: (0, 0)),
            pl.BlockSpec((1, h_p), lambda i: (0, 0)),
            pl.BlockSpec((1, h_p), lambda i: (0, 0)),
            pl.BlockSpec((h_p, c_p), lambda i: (0, 0)),
            pl.BlockSpec((1, c_p), lambda i: (0, 0)),
        ],
        out_specs=pl.BlockSpec((block_rows, c_p), lambda i: (i, 0)),
        compiler_params=pltpu.CompilerParams(
            dimension_semantics=("parallel",)),
    )(xb, w1b, b1p, scale, shift, w2b, b2p)

    return out_pad[:n, :nclass]


if __name__ == "__main__":
    def reference(x, w1, b1, gamma, beta, w2, b2, eps=1e-5):
        # Pure-JAX reference with the same bf16-matmul / f32-BN numerics,
        # PyTorch-style batch mean + biased variance.
        h = jnp.dot(x.astype(jnp.bfloat16), w1.astype(jnp.bfloat16),
                    preferred_element_type=jnp.float32) + b1
        mu = jnp.mean(h, axis=0, keepdims=True)
        var = jnp.mean((h - mu) ** 2, axis=0, keepdims=True)
        hn = (h - mu) * jax.lax.rsqrt(var + eps) * gamma + beta
        hn = jnp.maximum(hn, 0.0)
        return jnp.dot(hn.astype(jnp.bfloat16), w2.astype(jnp.bfloat16),
                       preferred_element_type=jnp.float32) + b2

    nfeat, nhid, nclass = 32, 64, 8
    key = jax.random.PRNGKey(0)
    kw1, kb1, kw2, kb2, kx1, kx2 = jax.random.split(key, 6)

    # PyTorch layer shapes, pre-transposed to (in, out) for the kernel.
    w1 = jax.random.normal(kw1, (nfeat, nhid), dtype=jnp.float32) * 0.1
    b1 = jax.random.normal(kb1, (1, nhid), dtype=jnp.float32) * 0.1
    w2 = jax.random.normal(kw2, (nhid, nclass), dtype=jnp.float32) * 0.1
    b2 = jax.random.normal(kb2, (1, nclass), dtype=jnp.float32) * 0.1
    gamma = jnp.ones((1, nhid), dtype=jnp.float32)   # BN weight init
    beta = jnp.zeros((1, nhid), dtype=jnp.float32)   # BN bias init

    # (a) small batch -> fused single-tile path (N=24, not a multiple of 16).
    x_small = jax.random.normal(kx1, (24, nfeat), dtype=jnp.float32)
    out_small = jax.block_until_ready(
        mlp_forward(x_small, w1, b1, gamma, beta, w2, b2))
    ref_small = reference(x_small, w1, b1, gamma, beta, w2, b2)
    assert out_small.shape == (24, nclass), f"bad shape {out_small.shape}"
    assert jnp.allclose(out_small, ref_small, atol=5e-3, rtol=5e-3), \
        "fused path mismatch vs reference"

    # (b) larger batch -> two-pass gridded path (exercises the megacore-split
    #     stats accumulator, the masked tail block, and the parallel pass 2).
    x_big = jax.random.normal(kx2, (1200, nfeat), dtype=jnp.float32)
    out_big = jax.block_until_ready(
        mlp_forward(x_big, w1, b1, gamma, beta, w2, b2))
    ref_big = reference(x_big, w1, b1, gamma, beta, w2, b2)
    assert out_big.shape == (1200, nclass), f"bad shape {out_big.shape}"
    assert jnp.allclose(out_big, ref_big, atol=5e-3, rtol=5e-3), \
        "gridded path mismatch vs reference"

    print("KERNEL_OK")
</pallas_src>

<mosaic_0001>
module attributes {stable_mosaic.version = 11 : i64} {
  func.func @_fused_kernel(%arg0: memref<32x128xbf16, #tpu.memory_space<vmem>>, %arg1: memref<128x128xbf16, #tpu.memory_space<vmem>>, %arg2: memref<1x128xf32, #tpu.memory_space<vmem>>, %arg3: memref<1x128xf32, #tpu.memory_space<vmem>>, %arg4: memref<1x128xf32, #tpu.memory_space<vmem>>, %arg5: memref<128x128xbf16, #tpu.memory_space<vmem>>, %arg6: memref<1x128xf32, #tpu.memory_space<vmem>>, %arg7: memref<32x128xf32, #tpu.memory_space<vmem>>) attributes {dimension_semantics = [], scalar_prefetch = 0 : i64, scratch_operands = 0 : i64, tpu.core_type = #tpu.core_type<tc>} {
    %c0 = arith.constant 0 : index
    %c0_0 = arith.constant 0 : index
    %0 = vector.load %arg0[%c0, %c0_0] : memref<32x128xbf16, #tpu.memory_space<vmem>>, vector<32x128xbf16>
    %c0_1 = arith.constant 0 : index
    %c0_2 = arith.constant 0 : index
    %1 = vector.load %arg1[%c0_1, %c0_2] : memref<128x128xbf16, #tpu.memory_space<vmem>>, vector<128x128xbf16>
    %cst = arith.constant dense<0.000000e+00> : vector<32x128xf32>
    %2 = tpu.matmul %0, %1, %cst {dimension_numbers = #tpu.dot_dimension_numbers<[1], [0], [0], [1], [0, 0, 1, 1], [], []>} : vector<32x128xbf16>, vector<128x128xbf16>, vector<32x128xf32> -> vector<32x128xf32>
    %c0_3 = arith.constant 0 : index
    %c0_4 = arith.constant 0 : index
    %3 = vector.load %arg2[%c0_3, %c0_4] : memref<1x128xf32, #tpu.memory_space<vmem>>, vector<1x128xf32>
    %4 = vector.broadcast %3 : vector<1x128xf32> to vector<32x128xf32>
    %5 = arith.addf %2, %4 : vector<32x128xf32>
    %6 = tpu.iota {dimensions = array<i32: 0>} : vector<32x128xi32>
    %c24_i32 = arith.constant 24 : i32
    %7 = vector.broadcast %c24_i32 : i32 to vector<32x128xi32>
    %8 = arith.cmpi slt, %6, %7 : vector<32x128xi32>
    %cst_5 = arith.constant 0.000000e+00 : f32
    %9 = vector.broadcast %cst_5 : f32 to vector<32x128xf32>
    %10 = arith.select %8, %5, %9 : vector<32x128xi1>, vector<32x128xf32>
    %cst_6 = arith.constant dense<0.000000e+00> : vector<128xf32>
    %11 = vector.multi_reduction <add>, %10, %cst_6 [0] : vector<32x128xf32> to vector<128xf32>
    %12 = vector.shape_cast %11 : vector<128xf32> to vector<1x128xf32>
    %cst_7 = arith.constant 0.0416666679 : f32
    %13 = vector.broadcast %cst_7 : f32 to vector<1x128xf32>
    %14 = arith.mulf %12, %13 : vector<1x128xf32>
    %15 = vector.broadcast %14 : vector<1x128xf32> to vector<32x128xf32>
    %16 = arith.subf %5, %15 : vector<32x128xf32>
    %cst_8 = arith.constant 0.000000e+00 : f32
    %17 = vector.broadcast %cst_8 : f32 to vector<32x128xf32>
    %18 = arith.select %8, %16, %17 : vector<32x128xi1>, vector<32x128xf32>
    %19 = arith.mulf %18, %18 : vector<32x128xf32>
    %cst_9 = arith.constant dense<0.000000e+00> : vector<128xf32>
    %20 = vector.multi_reduction <add>, %19, %cst_9 [0] : vector<32x128xf32> to vector<128xf32>
    %21 = vector.shape_cast %20 : vector<128xf32> to vector<1x128xf32>
    %cst_10 = arith.constant 0.0416666679 : f32
    %22 = vector.broadcast %cst_10 : f32 to vector<1x128xf32>
    %23 = arith.mulf %21, %22 : vector<1x128xf32>
    %c0_11 = arith.constant 0 : index
    %c0_12 = arith.constant 0 : index
    %24 = vector.load %arg3[%c0_11, %c0_12] : memref<1x128xf32, #tpu.memory_space<vmem>>, vector<1x128xf32>
    %cst_13 = arith.constant 9.99999974E-6 : f32
    %25 = vector.broadcast %cst_13 : f32 to vector<1x128xf32>
    %26 = arith.addf %23, %25 : vector<1x128xf32>
    %27 = math.rsqrt %26 : vector<1x128xf32>
    %28 = arith.mulf %24, %27 : vector<1x128xf32>
    %c0_14 = arith.constant 0 : index
    %c0_15 = arith.constant 0 : index
    %29 = vector.load %arg4[%c0_14, %c0_15] : memref<1x128xf32, #tpu.memory_space<vmem>>, vector<1x128xf32>
    %30 = arith.mulf %14, %28 : vector<1x128xf32>
    %31 = arith.subf %29, %30 : vector<1x128xf32>
    %32 = vector.broadcast %28 : vector<1x128xf32> to vector<32x128xf32>
    %33 = arith.mulf %5, %32 : vector<32x128xf32>
    %34 = vector.broadcast %31 : vector<1x128xf32> to vector<32x128xf32>
    %35 = arith.addf %33, %34 : vector<32x128xf32>
    %cst_16 = arith.constant 0.000000e+00 : f32
    %36 = vector.broadcast %cst_16 : f32 to vector<32x128xf32>
    %37 = arith.maximumf %35, %36 : vector<32x128xf32>
    %38 = arith.truncf %37 : vector<32x128xf32> to vector<32x128xbf16>
    %c0_17 = arith.constant 0 : index
    %c0_18 = arith.constant 0 : index
    %39 = vector.load %arg5[%c0_17, %c0_18] : memref<128x128xbf16, #tpu.memory_space<vmem>>, vector<128x128xbf16>
    %cst_19 = arith.constant dense<0.000000e+00> : vector<32x128xf32>
    %40 = tpu.matmul %38, %39, %cst_19 {dimension_numbers = #tpu.dot_dimension_numbers<[1], [0], [0], [1], [0, 0, 1, 1], [], []>} : vector<32x128xbf16>, vector<128x128xbf16>, vector<32x128xf32> -> vector<32x128xf32>
    %c0_20 = arith.constant 0 : index
    %c0_21 = arith.constant 0 : index
    %41 = vector.load %arg6[%c0_20, %c0_21] : memref<1x128xf32, #tpu.memory_space<vmem>>, vector<1x128xf32>
    %42 = vector.broadcast %41 : vector<1x128xf32> to vector<32x128xf32>
    %43 = arith.addf %40, %42 : vector<32x128xf32>
    %c0_22 = arith.constant 0 : index
    %c0_23 = arith.constant 0 : index
    %44 = vector.load %arg7[%c0_22, %c0_23] : memref<32x128xf32, #tpu.memory_space<vmem>>, vector<32x128xf32>
    tpu.vector_store %arg7[%c0_22, %c0_23], %43 {strides = array<i32>} : memref<32x128xf32, #tpu.memory_space<vmem>>, vector<32x128xf32>,
    return
  }
}

</mosaic_0001>

<llo_original>
// kernel: tpu_custom_call.1
$region0: #{tpu_custom_call.1}
  #allocation0 [shape = 'u32[]', space=smem, size = 0x4, offset = 0x4, fixed_abs, tag = 'smem constant byte address 0x4 - core index']
  #allocation1 [shape = 'u32[72,128]{1,0:T(1,128)}', space=vmem, size = 0x9000, scoped, tag = 'internal scratch']
  %s0 = inlined_call_operand.hbm [shape: bf16[32,128], index: 0, kind: input, shape index: {}]
  %s1 = inlined_call_operand.hbm [shape: bf16[128,128], index: 1, kind: input, shape index: {}]
  %s2 = inlined_call_operand.vmem [shape: f32[1,128], index: 2, kind: input, shape index: {}]
  %s3 = inlined_call_operand.vmem [shape: f32[1,128], index: 3, kind: input, shape index: {}]
  %s4 = inlined_call_operand.vmem [shape: f32[1,128], index: 4, kind: input, shape index: {}]
  %s5 = inlined_call_operand.hbm [shape: bf16[128,128], index: 5, kind: input, shape index: {}]
  %s6 = inlined_call_operand.vmem [shape: f32[1,128], index: 6, kind: input, shape index: {}]
  %s7 = inlined_call_operand.hbm [shape: f32[32,128], index: 7, kind: output, shape index: {}]
  %s8 = sld [smem:[#allocation0]]
  $region50: #{tpu_custom_call.1} parent=0
    _
  %s10 = ssub.s32 1, %s8
  %s11 = scalar_select 0, %s10, %s8
  $region1: #{tpu_custom_call.1} parent=0
    #allocation2 [shape = 'u8[8192]{0}', space=vmem, size = 0x2000, scoped, tag = 'input window, operand 0, single buffered']
    #allocation3 [shape = 's32[1]{0}', space=sflag, size = 0x4, scoped, tag = 'scoped memory for tpu_custom_call.1']
    #allocation4 [shape = 's32[1]{0}', space=sflag, size = 0x4, scoped, tag = 'scoped memory for tpu_custom_call.1']
    #allocation5 [shape = 'u8[32768]{0}', space=vmem, size = 0x8000, scoped, tag = 'input window, operand 1, single buffered']
    #allocation6 [shape = 's32[1]{0}', space=sflag, size = 0x4, scoped, tag = 'scoped memory for tpu_custom_call.1']
    #allocation7 [shape = 'u8[32768]{0}', space=vmem, size = 0x8000, scoped, tag = 'input window, operand 5, single buffered']
    #allocation8 [shape = 'u8[16384]{0}', space=vmem, size = 0x4000, scoped, tag = 'output window, operand 0, single buffered']
    %12 = vsyncpa [#allocation3], 0
    %13 = vsyncpa [#allocation6], 0
    %14 = vsyncpa [#allocation4], 0
    // Predicated region
    $region2: #{tpu_custom_call.1} parent=1 // pred_check
      _
    $region3: #{tpu_custom_call.1} parent=1 // pred_check_branch
      %16 = sbr.rel (0) target = $region5
    $region4: #{tpu_custom_call.1} parent=1 // pred_region
      %18 = vsyncadd [#allocation3], 0
      %s19 = sshll.u32 %s0, 4
      %s20 = int_to_ptr.hbm [resolvable:$true] %s19
      %s21 = sshll.u32 [#allocation2], 4
      %s22 = int_to_ptr.vmem [resolvable:$true] %s21
      %27 = dma.hbm_to_vmem [thread:$0]  %s20, 256, %s22, [#allocation3], 64, 64, 4
    $region5: #{tpu_custom_call.1} parent=1 // pred_fallthru
      _
    // Predicated region
    $region6: #{tpu_custom_call.1} parent=1 // pred_check
      _
    $region7: #{tpu_custom_call.1} parent=1 // pred_check_branch
      %29 = sbr.rel (0) target = $region9
    $region8: #{tpu_custom_call.1} parent=1 // pred_region
      %31 = vsyncadd [#allocation6], 0
      %s32 = sshll.u32 %s1, 4
      %s33 = int_to_ptr.hbm [resolvable:$true] %s32
      %s34 = sshll.u32 [#allocation5], 4
      %s35 = int_to_ptr.vmem [resolvable:$true] %s34
      %40 = dma.hbm_to_vmem [thread:$0]  %s33, 1024, %s35, [#allocation6], 64, 64, 4
    $region9: #{tpu_custom_call.1} parent=1 // pred_fallthru
      _
    // Predicated region
    $region10: #{tpu_custom_call.1} parent=1 // pred_check
      _
    $region11: #{tpu_custom_call.1} parent=1 // pred_check_branch
      %42 = sbr.rel (0) target = $region13
    $region12: #{tpu_custom_call.1} parent=1 // pred_region
      _
    $region13: #{tpu_custom_call.1} parent=1 // pred_fallthru
      _
    // Predicated region
    $region14: #{tpu_custom_call.1} parent=1 // pred_check
      _
    $region15: #{tpu_custom_call.1} parent=1 // pred_check_branch
      %44 = sbr.rel (0) target = $region17
    $region16: #{tpu_custom_call.1} parent=1 // pred_region
      _
    $region17: #{tpu_custom_call.1} parent=1 // pred_fallthru
      _
    // Predicated region
    $region18: #{tpu_custom_call.1} parent=1 // pred_check
      _
    $region19: #{tpu_custom_call.1} parent=1 // pred_check_branch
      %46 = sbr.rel (0) target = $region21
    $region20: #{tpu_custom_call.1} parent=1 // pred_region
      _
    $region21: #{tpu_custom_call.1} parent=1 // pred_fallthru
      _
    // Predicated region
    $region22: #{tpu_custom_call.1} parent=1 // pred_check
      _
    $region23: #{tpu_custom_call.1} parent=1 // pred_check_branch
      %48 = sbr.rel (0) target = $region25
    $region24: #{tpu_custom_call.1} parent=1 // pred_region
      %50 = vsyncadd [#allocation6], 0
      %s51 = sshll.u32 %s5, 4
      %s52 = int_to_ptr.hbm [resolvable:$true] %s51
      %s53 = sshll.u32 [#allocation7], 4
      %s54 = int_to_ptr.vmem [resolvable:$true] %s53
      %59 = dma.hbm_to_vmem [thread:$0]  %s52, 1024, %s54, [#allocation6], 64, 64, 4
    $region25: #{tpu_custom_call.1} parent=1 // pred_fallthru
      _
    // Predicated region
    $region26: #{tpu_custom_call.1} parent=1 // pred_check
      _
    $region27: #{tpu_custom_call.1} parent=1 // pred_check_branch
      %61 = sbr.rel (0) target = $region29
    $region28: #{tpu_custom_call.1} parent=1 // pred_region
      _
    $region29: #{tpu_custom_call.1} parent=1 // pred_fallthru
      _
    // Predicated region
    $region30: #{tpu_custom_call.1} parent=1 // pred_check
      _
    $region31: #{tpu_custom_call.1} parent=1 // pred_check_branch
      %63 = sbr.rel (0) target = $region33
    $region32: #{tpu_custom_call.1} parent=1 // pred_region
      %65 = dma.done [#allocation3], 256
    $region33: #{tpu_custom_call.1} parent=1 // pred_fallthru
      _
    // Predicated region
    $region34: #{tpu_custom_call.1} parent=1 // pred_check
      _
    $region35: #{tpu_custom_call.1} parent=1 // pred_check_branch
      %67 = sbr.rel (0) target = $region37
    $region36: #{tpu_custom_call.1} parent=1 // pred_region
      %69 = dma.done [#allocation6], 1024
    $region37: #{tpu_custom_call.1} parent=1 // pred_fallthru
      _
    // Predicated region
    $region38: #{tpu_custom_call.1} parent=1 // pred_check
      _
    $region39: #{tpu_custom_call.1} parent=1 // pred_check_branch
      %71 = sbr.rel (0) target = $region41
    $region40: #{tpu_custom_call.1} parent=1 // pred_region
      %73 = dma.done [#allocation6], 1024
    $region41: #{tpu_custom_call.1} parent=1 // pred_fallthru
      _
    %v74 = vld [vmem:[#allocation2] sm:$0xf]
    %v75 = vld [vmem:[#allocation2 + $0x4] sm:$0xf]
    %v76 = vld [vmem:[#allocation2 + $0x8] sm:$0xf]
    %v77 = vld [vmem:[#allocation2 + $0xc] sm:$0xf]
    %v78 = vld [vmem:[#allocation5] sm:$0xf]
    %v79 = vld [vmem:[#allocation5 + $0x4] sm:$0xf]
    %v80 = vld [vmem:[#allocation5 + $0x8] sm:$0xf]
    %v81 = vld [vmem:[#allocation5 + $0xc] sm:$0xf]
    %v82 = vld [vmem:[#allocation5 + $0x10] sm:$0xf]
    %v83 = vld [vmem:[#allocation5 + $0x14] sm:$0xf]
    %v84 = vld [vmem:[#allocation5 + $0x18] sm:$0xf]
    %v85 = vld [vmem:[#allocation5 + $0x1c] sm:$0xf]
    %v86 = vld [vmem:[#allocation5 + $0x20] sm:$0xf]
    %v87 = vld [vmem:[#allocation5 + $0x24] sm:$0xf]
    %v88 = vld [vmem:[#allocation5 + $0x28] sm:$0xf]
    %v89 = vld [vmem:[#allocation5 + $0x2c] sm:$0xf]
    %v90 = vld [vmem:[#allocation5 + $0x30] sm:$0xf]
    %v91 = vld [vmem:[#allocation5 + $0x34] sm:$0xf]
    %v92 = vld [vmem:[#allocation5 + $0x38] sm:$0xf]
    %v93 = vld [vmem:[#allocation5 + $0x3c] sm:$0xf]
    %v94 = vld [vmem:[%s2] sm:$0x1]
    %v96 = vperm.slane %v94, 0
    %v102 = vunpack.c.l.b16 %v74
    %v103 = vunpack.c.l.b16 %v75
    %v104 = vunpack.c.l.b16 %v76
    %v105 = vunpack.c.l.b16 %v77
    %v106 = vpack.c.b16 %v103, %v102
    %v107 = vpack.c.b16 %v105, %v104
    %v126 = vunpack.c.l.b16 %v78
    %v127 = vunpack.c.l.b16 %v79
    %v128 = vunpack.c.l.b16 %v80
    %v129 = vunpack.c.l.b16 %v81
    %v130 = vunpack.c.l.b16 %v82
    %v131 = vunpack.c.l.b16 %v83
    %v132 = vunpack.c.l.b16 %v84
    %v133 = vunpack.c.l.b16 %v85
    %v134 = vunpack.c.l.b16 %v86
    %v135 = vunpack.c.l.b16 %v87
    %v136 = vunpack.c.l.b16 %v88
    %v137 = vunpack.c.l.b16 %v89
    %v138 = vunpack.c.l.b16 %v90
    %v139 = vunpack.c.l.b16 %v91
    %v140 = vunpack.c.l.b16 %v92
    %v141 = vunpack.c.l.b16 %v93
    %v142 = vpack.c.b16 %v127, %v126
    %v143 = vpack.c.b16 %v129, %v128
    %v144 = vpack.c.b16 %v131, %v130
    %v145 = vpack.c.b16 %v133, %v132
    %v146 = vpack.c.b16 %v135, %v134
    %v147 = vpack.c.b16 %v137, %v136
    %v148 = vpack.c.b16 %v139, %v138
    %v149 = vpack.c.b16 %v141, %v140
    %158 = vmatpush.bf16.msra.mxu0 %v149
    %159 = vmatpush.bf16.msra.mxu0 %v148
    %160 = vmatpush.bf16.msra.mxu0 %v147
    %161 = vmatpush.bf16.msra.mxu0 %v146
    %162 = vmatpush.bf16.msra.mxu0 %v145
    %163 = vmatpush.bf16.msra.mxu0 %v144
    %164 = vmatpush.bf16.msra.mxu0 %v143
    %165 = vmatpush.bf16.msra.mxu0 %v142
    %166 = vmatmul.bf16.gmra.mxu0 %v106
    %v167 = vpop.f32.mrf.mxu0
    %v168 = vadd.f32 %v96, %v167
    %v169 = vpop.f32.mrf.mxu0
    %v170 = vadd.f32 %v96, %v169
    %171 = vmatmul.bf16.gmra.mxu0 %v107
    %v172 = vpop.f32.mrf.mxu0
    %v173 = vadd.f32 %v96, %v172
    %v174 = vpop.f32.mrf.mxu0
    %v175 = vadd.f32 %v96, %v174
    %176 = vdwg.mxu0
    %v177 = vlaneseq
    %v178 = vshrl.u32 %v177, 7
    %v179 = vadd.s32 %v178, 8
    %v180 = vadd.s32 %v178, 16
    %v181 = vadd.s32 %v178, 24
    %vm182 = vcmp.lt.s32.totalorder %v178, 24
    %vm183 = vcmp.lt.s32.totalorder %v179, 24
    %vm184 = vcmp.lt.s32.totalorder %v180, 24
    %vm185 = vcmp.lt.s32.totalorder %v181, 24
    %v186 = vsel %vm182, %v168, 0.0
    %v187 = vsel %vm183, %v170, 0.0
    %v188 = vsel %vm184, %v173, 0.0
    %v189 = vsel %vm185, %v175, 0.0
    %v190 = vadd.f32 %v186, %v187
    %v191 = vadd.f32 %v190, %v188
    %v192 = vadd.f32 %v191, %v189
    %v193 = vrot.slane %v192, 4
    %v194 = vadd.f32 %v192, %v193
    %v195 = vrot.slane %v194, 2
    %v196 = vadd.f32 %v194, %v195
    %v197 = vrot.slane %v196, 1
    %v198 = vadd.f32 %v196, %v197
    %v199 = vmul.f32 %v198, 0.041666668
    %v200 = vsub.f32 %v168, %v199
    %v201 = vsub.f32 %v170, %v199
    %v202 = vsub.f32 %v173, %v199
    %v203 = vsub.f32 %v175, %v199
    %v204 = vsel %vm182, %v200, 0.0
    %v205 = vsel %vm183, %v201, 0.0
    %v206 = vsel %vm184, %v202, 0.0
    %v207 = vsel %vm185, %v203, 0.0
    %v208 = vmul.f32 %v204, %v204
    %v209 = vmul.f32 %v205, %v205
    %v210 = vmul.f32 %v206, %v206
    %v211 = vmul.f32 %v207, %v207
    %v212 = vadd.f32 %v208, %v209
    %v213 = vadd.f32 %v212, %v210
    %v214 = vadd.f32 %v213, %v211
    %v215 = vrot.slane %v214, 4
    %v216 = vadd.f32 %v214, %v215
    %v217 = vrot.slane %v216, 2
    %v218 = vadd.f32 %v216, %v217
    %v219 = vrot.slane %v218, 1
    %v220 = vadd.f32 %v218, %v219
    %v221 = vmul.f32 %v220, 0.041666668
    %v222 = vld [vmem:[%s3] sm:$0x1]
    %v223 = vadd.f32 %v221, 1e-05
    %v224 = vrsqrt.pop %v223
    %v225 = vmul.f32 %v224, %v223
    %v226 = vmul.f32 %v225, %v224
    %v227 = vmul.f32 0.5, %v226
    %v228 = vsub.f32 1.5, %v227
    %v229 = vmul.f32 %v224, %v228
    %vm230 = vweird.f32 %v223
    %vm231 = vweird.f32 %v224
    %vm232 = vmor %vm230, %vm231
    %v233 = vsel %vm232, %v224, %v229
    %v234 = vmul.f32 %v222, %v233
    %v235 = vld [vmem:[%s4] sm:$0x1]
    %v236 = vmul.f32 %v199, %v234
    %v237 = vsub.f32 %v235, %v236
    %v239 = vperm.slane %v234, 0
    %v241 = vmul.f32 %v168, %v239
    %v242 = vmul.f32 %v170, %v239
    %v243 = vmul.f32 %v173, %v239
    %v244 = vmul.f32 %v175, %v239
    %v246 = vperm.slane %v237, 0
    %v248 = vadd.f32 %v241, %v246
    %v249 = vadd.f32 %v242, %v246
    %v250 = vadd.f32 %v243, %v246
    %v251 = vadd.f32 %v244, %v246
    %v252 = vmax.f32 %v248, 0.0
    %v253 = vmax.f32 %v249, 0.0
    %v254 = vmax.f32 %v250, 0.0
    %v255 = vmax.f32 %v251, 0.0
    %v256 = vpack.c.bf16 %v253, %v252
    %v257 = vpack.c.bf16 %v255, %v254
    %v258 = vld [vmem:[#allocation7] sm:$0xf]
    %v259 = vld [vmem:[#allocation7 + $0x4] sm:$0xf]
    %v260 = vld [vmem:[#allocation7 + $0x8] sm:$0xf]
    %v261 = vld [vmem:[#allocation7 + $0xc] sm:$0xf]
    %v262 = vld [vmem:[#allocation7 + $0x10] sm:$0xf]
    %v263 = vld [vmem:[#allocation7 + $0x14] sm:$0xf]
    %v264 = vld [vmem:[#allocation7 + $0x18] sm:$0xf]
    %v265 = vld [vmem:[#allocation7 + $0x1c] sm:$0xf]
    %v266 = vld [vmem:[#allocation7 + $0x20] sm:$0xf]
    %v267 = vld [vmem:[#allocation7 + $0x24] sm:$0xf]
    %v268 = vld [vmem:[#allocation7 + $0x28] sm:$0xf]
    %v269 = vld [vmem:[#allocation7 + $0x2c] sm:$0xf]
    %v270 = vld [vmem:[#allocation7 + $0x30] sm:$0xf]
    %v271 = vld [vmem:[#allocation7 + $0x34] sm:$0xf]
    %v272 = vld [vmem:[#allocation7 + $0x38] sm:$0xf]
    %v273 = vld [vmem:[#allocation7 + $0x3c] sm:$0xf]
    %v274 = vld [vmem:[%s6] sm:$0x1]
    %v276 = vperm.slane %v274, 0
    %v294 = vunpack.c.l.b16 %v258
    %v295 = vunpack.c.l.b16 %v259
    %v296 = vunpack.c.l.b16 %v260
    %v297 = vunpack.c.l.b16 %v261
    %v298 = vunpack.c.l.b16 %v262
    %v299 = vunpack.c.l.b16 %v263
    %v300 = vunpack.c.l.b16 %v264
    %v301 = vunpack.c.l.b16 %v265
    %v302 = vunpack.c.l.b16 %v266
    %v303 = vunpack.c.l.b16 %v267
    %v304 = vunpack.c.l.b16 %v268
    %v305 = vunpack.c.l.b16 %v269
    %v306 = vunpack.c.l.b16 %v270
    %v307 = vunpack.c.l.b16 %v271
    %v308 = vunpack.c.l.b16 %v272
    %v309 = vunpack.c.l.b16 %v273
    %v310 = vpack.c.b16 %v295, %v294
    %v311 = vpack.c.b16 %v297, %v296
    %v312 = vpack.c.b16 %v299, %v298
    %v313 = vpack.c.b16 %v301, %v300
    %v314 = vpack.c.b16 %v303, %v302
    %v315 = vpack.c.b16 %v305, %v304
    %v316 = vpack.c.b16 %v307, %v306
    %v317 = vpack.c.b16 %v309, %v308
    %326 = vmatpush.bf16.msra.mxu0 %v317
    %327 = vmatpush.bf16.msra.mxu0 %v316
    %328 = vmatpush.bf16.msra.mxu0 %v315
    %329 = vmatpush.bf16.msra.mxu0 %v314
    %330 = vmatpush.bf16.msra.mxu0 %v313
    %331 = vmatpush.bf16.msra.mxu0 %v312
    %332 = vmatpush.bf16.msra.mxu0 %v311
    %333 = vmatpush.bf16.msra.mxu0 %v310
    %334 = vmatmul.bf16.gmra.mxu0 %v256
    %v335 = vpop.f32.mrf.mxu0
    %v336 = vadd.f32 %v276, %v335
    %v337 = vpop.f32.mrf.mxu0
    %v338 = vadd.f32 %v276, %v337
    %339 = vmatmul.bf16.gmra.mxu0 %v257
    %v340 = vpop.f32.mrf.mxu0
    %v341 = vadd.f32 %v276, %v340
    %v342 = vpop.f32.mrf.mxu0
    %v343 = vadd.f32 %v276, %v342
    %344 = vdwg.mxu0
    %345 = vst [vmem:[#allocation8] sm:$0xff] %v336
    %346 = vst [vmem:[#allocation8 + $0x8] sm:$0xff] %v338
    %347 = vst [vmem:[#allocation8 + $0x10] sm:$0xff] %v341
    %348 = vst [vmem:[#allocation8 + $0x18] sm:$0xff] %v343
    // Predicated region
    $region42: #{tpu_custom_call.1} parent=1 // pred_check
      _
    $region43: #{tpu_custom_call.1} parent=1 // pred_check_branch
      %350 = sbr.rel (0) target = $region45
    $region44: #{tpu_custom_call.1} parent=1 // pred_region
      %352 = vsyncadd [#allocation4], 0
      %s353 = sshll.u32 [#allocation8], 4
      %s354 = int_to_ptr.vmem [resolvable:$true] %s353
      %s355 = sshll.u32 %s7, 4
      %s356 = int_to_ptr.hbm [resolvable:$true] %s355
      %361 = dma.vmem_to_hbm [thread:$0]  %s354, 512, %s356, [#allocation4], 128, 128, 8
    $region45: #{tpu_custom_call.1} parent=1 // pred_fallthru
      _
    // Predicated region
    $region46: #{tpu_custom_call.1} parent=1 // pred_check
      _
    $region47: #{tpu_custom_call.1} parent=1 // pred_check_branch
      %363 = sbr.rel (0) target = $region49
    $region48: #{tpu_custom_call.1} parent=1 // pred_region
      %365 = dma.done [#allocation4], 512
    $region49: #{tpu_custom_call.1} parent=1 // pred_fallthru
      _
    %366 = vsyncpa [#allocation3], 1
    %367 = vsyncpa [#allocation6], 1
    %368 = vsyncpa [#allocation4], 1

</llo_original>
